<compile_context>
chip_gen: v5e
topology: v5e:2x2
jax: 0.10.0
libtpu: 0.0.40
codegen_flags: <defaults>
</compile_context>

<pallas_src>
import jax
import jax.numpy as jnp
from jax.experimental import pallas as pl
from jax.experimental.pallas import tpu as pltpu


# ---------------------------------------------------------------------------
# 0) True identity path: no kernel, no HBM traffic.  This is the only real
#    "optimization" for an empty forward.
# ---------------------------------------------------------------------------
def identity_passthrough(x: jax.Array) -> jax.Array:
    return x


# ---------------------------------------------------------------------------
# 1) HBM -> HBM single-DMA identity copy (preferred demonstration kernel).
# ---------------------------------------------------------------------------
def _dma_identity_kernel(x_hbm, o_hbm, sem):
    # One full-array DMA straight between HBM buffers: no VMEM round trip,
    # no vreg/VLIW involvement, runs at the DMA/HBM roofline.
    cp = pltpu.make_async_copy(x_hbm, o_hbm, sem)
    cp.start()
    cp.wait()


def dma_identity_copy(x: jax.Array) -> jax.Array:
    itemsize = jnp.dtype(x.dtype).itemsize
    return pl.pallas_call(
        _dma_identity_kernel,
        out_shape=jax.ShapeDtypeStruct(x.shape, x.dtype),
        in_specs=[pl.BlockSpec(memory_space=pl.ANY)],
        out_specs=pl.BlockSpec(memory_space=pl.ANY),
        scratch_shapes=[pltpu.SemaphoreType.DMA],
        cost_estimate=pl.CostEstimate(
            flops=0, transcendentals=0, bytes_accessed=2 * x.size * itemsize
        ),
    )(x)


# ---------------------------------------------------------------------------
# 2) Tiled, lane-dense, VMEM-staged identity copy (BlockSpec pipelining demo).
# ---------------------------------------------------------------------------
_SUBLANE_PACK = {4: 8, 2: 16, 1: 32}  # itemsize -> sublane packing


def _tpu_vmem_bytes() -> int:
    try:
        return int(pltpu.get_tpu_info().vmem_capacity_bytes)
    except Exception:
        return 128 << 20  # v5e/v6e default if the query is unavailable


def _copy_tile_kernel(x_ref, o_ref):
    # Bare tile copy: no casts / elementwise decoration so the store path
    # stays unmasked (important on v5e's single vst slot).
    o_ref[...] = x_ref[...]


def tiled_identity_copy(x: jax.Array) -> jax.Array:
    orig_shape = x.shape
    total = int(x.size)
    itemsize = jnp.dtype(x.dtype).itemsize
    sub = _SUBLANE_PACK.get(itemsize, 8)

    # Generation-aware tile target + explicit scoped-VMEM limit.
    vmem_bytes = _tpu_vmem_bytes()
    if vmem_bytes <= (64 << 20):
        # v7x: 64 MiB physical VMEM / TC -> keep 4x double-buffered footprint
        # comfortably inside the 32 MiB scoped default.
        tile_bytes = 1 << 20
        vmem_limit = 32 << 20
    else:
        # v5e / v6e: 128 MiB physical -> bigger tiles amortize per-step
        # overhead; raise the scoped limit past the 16/32 MiB defaults.
        tile_bytes = 2 << 20
        vmem_limit = 64 << 20

    # Lane-dense flattened 2D view: cols is a multiple of 128 (unmasked vst)
    # and capped at 2048 so a row tile can never blow VMEM regardless of the
    # original spatial extent (works for 4D NCHW and 5D NCDHW alike).
    flat = x.reshape(-1)
    cols = None
    for c in (2048, 1024, 512, 256, 128):
        if total % c == 0:
            cols = c
            break
    padded = total
    if cols is None:
        # Lane-sparse fallback: pad in the wrapper instead of emitting masked
        # vst.msk partial stores (measured ~4.5x wall-minus-compute penalty).
        cols = 128
        padded = pl.cdiv(total, cols) * cols
        flat = jnp.pad(flat, (0, padded - total))
    rows = padded // cols
    x2d = flat.reshape(rows, cols)

    # Row tile sized to the generation-aware byte target, rounded to the
    # dtype's sublane packing (8 for f32, 16 for bf16, 32 for int8/fp8).
    tm = max(sub, (tile_bytes // (cols * itemsize)) // sub * sub)
    tm = min(tm, rows)  # if tm == rows the full-extent rule applies
    grid = (pl.cdiv(rows, tm),)

    out2d = pl.pallas_call(
        _copy_tile_kernel,
        out_shape=jax.ShapeDtypeStruct((rows, cols), x.dtype),
        grid=grid,
        in_specs=[pl.BlockSpec((tm, cols), lambda i: (i, 0))],
        out_specs=pl.BlockSpec((tm, cols), lambda i: (i, 0)),
        compiler_params=pltpu.CompilerParams(
            # Row tiles are independent: shard across v7x's 2 TensorCores
            # (no-op on single-TC v5e/v6e).
            dimension_semantics=("parallel",),
            vmem_limit_bytes=vmem_limit,
        ),
        cost_estimate=pl.CostEstimate(
            flops=0, transcendentals=0, bytes_accessed=2 * padded * itemsize
        ),
    )(x2d)

    out_flat = out2d.reshape(-1)
    if padded != total:
        out_flat = out_flat[:total]
    return out_flat.reshape(orig_shape)


# ---------------------------------------------------------------------------
# JAX mirror of the (empty) PyTorch DecoderBlock.
# ---------------------------------------------------------------------------
class DecoderBlock:
    """Faithful mirror of the PyTorch stub: no params, forward returns None."""

    def __init__(self):
        # The PyTorch __init__ defines no parameters.
        pass

    def forward(self, *inputs):
        # Exactly mirrors `forward(self, *input): pass` — no computation,
        # returns None, launches no kernel (the best identity is no data
        # movement at all).
        return None

    def __call__(self, *inputs):
        return self.forward(*inputs)


if __name__ == "__main__":
    key = jax.random.PRNGKey(0)
    k4, k5 = jax.random.split(key)

    # Small inputs consistent with V-Net decoder feature maps:
    #   4D NCHW and the usual 5D NCDHW volume.
    x4 = jax.random.normal(k4, (2, 4, 16, 16), dtype=jnp.float32)
    x5 = jax.random.normal(k5, (2, 4, 8, 16, 16), dtype=jnp.float32)

    # HBM -> HBM DMA identity copy (pure DMA roofline, no VMEM staging).
    y4 = dma_identity_copy(x4)
    y5 = dma_identity_copy(x5)
    jax.block_until_ready((y4, y5))
    assert y4.shape == x4.shape and y4.dtype == x4.dtype
    assert y5.shape == x5.shape and y5.dtype == x5.dtype
    assert bool(jnp.array_equal(y4, x4)) and bool(jnp.array_equal(y5, x5))

    # Tiled, lane-dense, VMEM-staged copy (BlockSpec pipelining demo).
    z4 = tiled_identity_copy(x4)
    z5 = tiled_identity_copy(x5)
    jax.block_until_ready((z4, z5))
    assert bool(jnp.array_equal(z4, x4)) and bool(jnp.array_equal(z5, x5))

    # The real identity path: no kernel, zero HBM traffic.
    assert identity_passthrough(x4) is x4

    # Faithful module semantics: forward performs no computation -> None.
    block = DecoderBlock()
    assert block(x4) is None

    print("KERNEL_OK")
</pallas_src>

<mosaic_0001>
module attributes {stable_mosaic.version = 11 : i64} {
  func.func @_dma_identity_kernel(%arg0: memref<2x4x16x16xf32, #tpu.memory_space<any>>, %arg1: memref<2x4x16x16xf32, #tpu.memory_space<any>>, %arg2: memref<!tpu.dma_semaphore, #tpu.memory_space<semaphore_mem>>) attributes {dimension_semantics = [], scalar_prefetch = 0 : i64, scratch_operands = 1 : i64, tpu.core_type = #tpu.core_type<tc>} {
    tpu.enqueue_dma source(%arg0 : memref<2x4x16x16xf32, #tpu.memory_space<any>>) target(%arg1 : memref<2x4x16x16xf32, #tpu.memory_space<any>>) target_semaphore(%arg2 : memref<!tpu.dma_semaphore, #tpu.memory_space<semaphore_mem>>)
    tpu.wait_dma2 semaphore(%arg2 : memref<!tpu.dma_semaphore, #tpu.memory_space<semaphore_mem>>) src(%arg0 : memref<2x4x16x16xf32, #tpu.memory_space<any>>) dst(%arg1 : memref<2x4x16x16xf32, #tpu.memory_space<any>>)
    return
  }
}

</mosaic_0001>

<llo_original>
// kernel: tpu_custom_call.1
$region0: #{tpu_custom_call.1}
  #allocation0 [shape = 'u32[]', space=smem, size = 0x4, offset = 0x4, fixed_abs, tag = 'smem constant byte address 0x4 - core index']
  #allocation1 [shape = 'u32[72,128]{1,0:T(1,128)}', space=vmem, size = 0x9000, scoped, tag = 'internal scratch']
  #allocation2 [shape = 's32[1]{0}', space=sflag, size = 0x4, scoped, tag = 'scratch operand']
  #allocation3 [shape = 's32[]', space=sflag, size = 0x4, offset = 0, fixed_abs, tag = 'sflag constant byte address 0x0 - dummy sync flag']
  #allocation4 [shape = 'u32[0]{0}', space=smem, size = 0, offset = 0, fixed_abs, tag = 'smem constant byte address 0x0 - null']
  %s0 = inlined_call_operand.hbm [shape: f32[2,4,16,16], index: 0, kind: input, shape index: {}]
  %s1 = inlined_call_operand.hbm [shape: f32[2,4,16,16], index: 1, kind: output, shape index: {}]
  %s2 = sld [smem:[#allocation0]]
  $region2: #{tpu_custom_call.1} parent=0
    _
  %s4 = ssub.s32 1, %s2
  %s5 = scalar_select 0, %s4, %s2
  %s7 = sshll.u32 1, 14
  %s8 = sxor.u32 4294967295, %s7
  %s10 = sshll.u32 %s0, 4
  %s11 = int_to_ptr.hbm [resolvable:$true] %s10
  %s12 = sshll.u32 %s1, 4
  %s13 = int_to_ptr.hbm [resolvable:$true] %s12
  %16 = dma.general %s11, 2048, %s13, [#allocation2], [#allocation3], [#allocation4], 0, 0
  %s17 = smul.u32 2, 4
  %s18 = smul.u32 %s17, 16
  %s19 = smul.u32 %s18, 1
  %s20 = sshll.u32 %s19, 4
  %21 = dma.done [#allocation2], %s20
  %22 = vsyncmov [#allocation2]
  %s23 = vpop.sfrf %22
  %p24 = scmp.eq.s32.totalorder %s23, 0
  %p25 = pneg %p24
  %27 = shalt.err (%p25)

</llo_original>
